<compile_context>
chip_gen: v6e
topology: v6e:2x2x1
jax: 0.10.0
libtpu: 0.0.40
codegen_flags: <defaults>
</compile_context>

<pallas_src>
import functools

import jax
import jax.numpy as jnp
from jax.experimental import pallas as pl
from jax.experimental.pallas import tpu as pltpu


def _policy_net_kernel(x_ref, w1_ref, b1_ref, w2_ref, b2_ref, w3_ref, b3_ref,
                       out_ref, *, action_dim, high_action):
    # fc1 + relu  (MXU in the streamed x dtype, f32 accumulate, f32 bias/relu)
    h1 = jnp.dot(x_ref[...], w1_ref[...],
                 preferred_element_type=jnp.float32) + b1_ref[...]
    h1 = jnp.maximum(h1, 0.0)

    # fc2 + relu
    h2 = jnp.dot(h1.astype(w2_ref.dtype), w2_ref[...],
                 preferred_element_type=jnp.float32) + b2_ref[...]
    h2 = jnp.maximum(h2, 0.0)

    # fc3 (output columns are lane-padded to >=128; pad columns are zeros)
    h3 = jnp.dot(h2.astype(w3_ref.dtype), w3_ref[...],
                 preferred_element_type=jnp.float32) + b3_ref[...]

    # Full-tile masked select: columns [0, A) -> tanh * high_action,
    # columns [A, ...) -> softplus + 1e-5.  No slicing, no concatenate.
    col = jax.lax.broadcasted_iota(jnp.int32, h3.shape, 1)
    mus = jnp.tanh(h3) * jnp.float32(high_action)
    # Numerically stable softplus (matches F.softplus / jax.nn.softplus, beta=1)
    sigmas = jnp.maximum(h3, 0.0) + jnp.log1p(jnp.exp(-jnp.abs(h3))) + 1e-05
    out_ref[...] = jnp.where(col < action_dim, mus, sigmas).astype(out_ref.dtype)


def _round_up(n, m):
    return ((n + m - 1) // m) * m


def _vmem_cap_bytes():
    """Generation-aware VMEM cap (per-TC capacity minus headroom)."""
    cap = None
    try:
        info = pltpu.get_tpu_info()
        cap = getattr(info, "vmem_capacity_bytes", None)
    except Exception:
        cap = None
    if not cap:
        cap = 64 << 20  # conservative: v7x per-TC capacity
    return max(8 << 20, int(cap) - (16 << 20))  # leave headroom for scratch


def policy_net_forward(x, params, high_action, action_dim, *,
                       block_b=1024, use_bf16=False):
    """x: (B, state_dim). params: dict of pre-transposed f32 weights/biases."""
    x = x.astype(jnp.float32)
    B, state_dim = x.shape
    w1, b1 = params["w1"], params["b1"]
    w2, b2 = params["w2"], params["b2"]
    w3, b3 = params["w3"], params["b3"]
    fc1_dim = w1.shape[1]
    fc2_dim = w2.shape[1]
    out_dim = 2 * action_dim
    assert w3.shape[1] == out_dim

    # Lane-pad the output to a full 128-lane multiple: zero-pad W3/b3 columns.
    out_pad = max(128, _round_up(out_dim, 128))
    w3p = jnp.pad(w3, ((0, 0), (0, out_pad - out_dim)))
    b3p = jnp.pad(b3, ((0, 0), (0, out_pad - out_dim)))

    # Streamed / MXU dtype. Biases and the tail math stay f32.
    comp_dt = jnp.bfloat16 if use_bf16 else jnp.float32
    x_c = x.astype(comp_dt)
    w1c, w2c, w3c = (w1.astype(comp_dt), w2.astype(comp_dt), w3p.astype(comp_dt))
    b1f, b2f, b3f = (b1.astype(jnp.float32), b2.astype(jnp.float32),
                     b3p.astype(jnp.float32))

    # Batch tile: multiple of 8 (sublane), capped at block_b, and capped at
    # ~B/2 so the grid has >=2 steps (lets "parallel" shard across v7x's 2 TCs).
    half = _round_up(max(1, pl.cdiv(B, 2)), 8)
    tb = max(8, min(_round_up(block_b, 8), half))
    b_pad = _round_up(B, tb)
    xp = x_c if b_pad == B else jnp.pad(x_c, ((0, b_pad - B), (0, 0)))
    grid = (b_pad // tb,)

    # VMEM budget: double-buffered streamed x/out blocks + (conservatively
    # double-buffered) resident weights, plus headroom; capped per generation.
    x_bytes = jnp.dtype(comp_dt).itemsize
    weight_bytes = sum(int(a.size) * a.dtype.itemsize
                       for a in (w1c, b1f, w2c, b2f, w3c, b3f))
    stream_bytes = 2 * tb * (state_dim * x_bytes + out_pad * 4)
    vmem_limit = int(min(_vmem_cap_bytes(),
                         max(4 << 20,
                             2 * weight_bytes + stream_bytes + (2 << 20))))

    flops = 2 * b_pad * (state_dim * fc1_dim + fc1_dim * fc2_dim
                         + fc2_dim * out_pad)
    transcendentals = 3 * b_pad * out_pad  # tanh + exp + log1p per element
    bytes_accessed = (b_pad * state_dim * x_bytes + b_pad * out_pad * 4
                      + weight_bytes)

    kernel = functools.partial(_policy_net_kernel,
                               action_dim=action_dim,
                               high_action=float(high_action))

    resident = lambda shape: pl.BlockSpec(shape, lambda i: (0, 0))

    out = pl.pallas_call(
        kernel,
        out_shape=jax.ShapeDtypeStruct((b_pad, out_pad), jnp.float32),
        grid=grid,
        in_specs=[
            pl.BlockSpec((tb, state_dim), lambda i: (i, 0)),         # x (streamed)
            resident((state_dim, fc1_dim)), resident((1, fc1_dim)),  # w1, b1
            resident((fc1_dim, fc2_dim)), resident((1, fc2_dim)),    # w2, b2
            resident((fc2_dim, out_pad)), resident((1, out_pad)),    # w3, b3
        ],
        out_specs=pl.BlockSpec((tb, out_pad), lambda i: (i, 0)),
        compiler_params=pltpu.CompilerParams(
            dimension_semantics=("parallel",),
            vmem_limit_bytes=vmem_limit,
        ),
        cost_estimate=pl.CostEstimate(
            flops=flops,
            transcendentals=transcendentals,
            bytes_accessed=bytes_accessed,
        ),
    )(xp, w1c, b1f, w2c, b2f, w3c, b3f)

    return out[:B, :out_dim]


def init_params(key, state_dim, fc1, fc2, action_dim):
    """Deterministic init mimicking torch.nn.Linear (uniform +/- 1/sqrt(fan_in)).
    Weights stored transposed: (in_features, out_features)."""
    ks = jax.random.split(key, 6)

    def lin(kw, kb, fan_in, fan_out):
        bound = 1.0 / jnp.sqrt(jnp.float32(fan_in))
        w = jax.random.uniform(kw, (fan_in, fan_out), jnp.float32, -bound, bound)
        b = jax.random.uniform(kb, (1, fan_out), jnp.float32, -bound, bound)
        return w, b

    w1, b1 = lin(ks[0], ks[1], state_dim, fc1)
    w2, b2 = lin(ks[2], ks[3], fc1, fc2)
    w3, b3 = lin(ks[4], ks[5], fc2, 2 * action_dim)
    return dict(w1=w1, b1=b1, w2=w2, b2=b2, w3=w3, b3=b3)


def reference_forward(x, params, high_action, action_dim):
    h1 = jax.nn.relu(x @ params["w1"] + params["b1"])
    h2 = jax.nn.relu(h1 @ params["w2"] + params["b2"])
    h3 = h2 @ params["w3"] + params["b3"]
    mus = jnp.tanh(h3[:, :action_dim]) * high_action
    sigmas = jax.nn.softplus(h3[:, action_dim:]) + 1e-05
    return jnp.concatenate([mus, sigmas], axis=1)


if __name__ == "__main__":
    # Small shapes consistent with the module's forward. B deliberately NOT a
    # multiple of the batch tile so the run exercises a multi-step grid
    # (>=2 steps -> megacore sharding path) plus tail padding.
    B, state_dim, fc1, fc2, action_dim = 20, 8, 32, 32, 4
    high_action = 2.0

    key = jax.random.PRNGKey(0)
    k_x, k_p = jax.random.split(key)
    x = jax.random.normal(k_x, (B, state_dim), jnp.float32)
    params = init_params(k_p, state_dim, fc1, fc2, action_dim)

    ref = reference_forward(x, params, high_action, action_dim)

    # f32 path: exact-semantics check.
    out = policy_net_forward(x, params, high_action, action_dim, block_b=16)
    out = jax.block_until_ready(out)
    assert out.shape == (B, 2 * action_dim)
    assert jnp.allclose(out, ref, atol=1e-5, rtol=1e-5), "f32 mismatch vs reference"

    # bf16-streaming path (v6e/v7x bandwidth win): f32 accumulate, f32 tail/out.
    out_bf16 = policy_net_forward(x, params, high_action, action_dim,
                                  block_b=16, use_bf16=True)
    out_bf16 = jax.block_until_ready(out_bf16)
    assert out_bf16.shape == (B, 2 * action_dim)
    assert jnp.allclose(out_bf16, ref, atol=5e-2, rtol=5e-2), "bf16 mismatch vs reference"

    print("KERNEL_OK")
</pallas_src>

<mosaic_0001>
module attributes {stable_mosaic.version = 11 : i64} {
  func.func @_policy_net_kernel(%arg0: i32, %arg1: memref<16x8xf32, #tpu.memory_space<vmem>>, %arg2: memref<8x32xf32, #tpu.memory_space<vmem>>, %arg3: memref<1x32xf32, #tpu.memory_space<vmem>>, %arg4: memref<32x32xf32, #tpu.memory_space<vmem>>, %arg5: memref<1x32xf32, #tpu.memory_space<vmem>>, %arg6: memref<32x128xf32, #tpu.memory_space<vmem>>, %arg7: memref<1x128xf32, #tpu.memory_space<vmem>>, %arg8: memref<16x128xf32, #tpu.memory_space<vmem>>) attributes {dimension_semantics = [#tpu.dimension_semantics<parallel>], iteration_bounds = array<i64: 2>, scalar_prefetch = 0 : i64, scratch_operands = 0 : i64, tpu.core_type = #tpu.core_type<tc>, window_params = [{transform_indices = @transform_0, window_bounds = array<i64: 16, 8>}, {pipeline_mode = #tpu.pipeline_mode<synchronous>, transform_indices = @transform_1, window_bounds = array<i64: 8, 32>}, {pipeline_mode = #tpu.pipeline_mode<synchronous>, transform_indices = @transform_2, window_bounds = array<i64: 1, 32>}, {pipeline_mode = #tpu.pipeline_mode<synchronous>, transform_indices = @transform_3, window_bounds = array<i64: 32, 32>}, {pipeline_mode = #tpu.pipeline_mode<synchronous>, transform_indices = @transform_4, window_bounds = array<i64: 1, 32>}, {pipeline_mode = #tpu.pipeline_mode<synchronous>, transform_indices = @transform_5, window_bounds = array<i64: 32, 128>}, {pipeline_mode = #tpu.pipeline_mode<synchronous>, transform_indices = @transform_6, window_bounds = array<i64: 1, 128>}, {transform_indices = @transform_7, window_bounds = array<i64: 16, 128>}]} {
    %c0 = arith.constant 0 : index
    %c0_0 = arith.constant 0 : index
    %0 = vector.load %arg1[%c0, %c0_0] : memref<16x8xf32, #tpu.memory_space<vmem>>, vector<16x8xf32>
    %c0_1 = arith.constant 0 : index
    %c0_2 = arith.constant 0 : index
    %1 = vector.load %arg2[%c0_1, %c0_2] : memref<8x32xf32, #tpu.memory_space<vmem>>, vector<8x32xf32>
    %cst = arith.constant dense<0.000000e+00> : vector<16x32xf32>
    %2 = tpu.matmul %0, %1, %cst {dimension_numbers = #tpu.dot_dimension_numbers<[1], [0], [0], [1], [0, 0, 1, 1], [], []>} : vector<16x8xf32>, vector<8x32xf32>, vector<16x32xf32> -> vector<16x32xf32>
    %c0_3 = arith.constant 0 : index
    %c0_4 = arith.constant 0 : index
    %3 = vector.load %arg3[%c0_3, %c0_4] : memref<1x32xf32, #tpu.memory_space<vmem>>, vector<1x32xf32>
    %4 = vector.broadcast %3 : vector<1x32xf32> to vector<16x32xf32>
    %5 = arith.addf %2, %4 : vector<16x32xf32>
    %cst_5 = arith.constant 0.000000e+00 : f32
    %6 = vector.broadcast %cst_5 : f32 to vector<16x32xf32>
    %7 = arith.maximumf %5, %6 : vector<16x32xf32>
    %c0_6 = arith.constant 0 : index
    %c0_7 = arith.constant 0 : index
    %8 = vector.load %arg4[%c0_6, %c0_7] : memref<32x32xf32, #tpu.memory_space<vmem>>, vector<32x32xf32>
    %cst_8 = arith.constant dense<0.000000e+00> : vector<16x32xf32>
    %9 = tpu.matmul %7, %8, %cst_8 {dimension_numbers = #tpu.dot_dimension_numbers<[1], [0], [0], [1], [0, 0, 1, 1], [], []>} : vector<16x32xf32>, vector<32x32xf32>, vector<16x32xf32> -> vector<16x32xf32>
    %c0_9 = arith.constant 0 : index
    %c0_10 = arith.constant 0 : index
    %10 = vector.load %arg5[%c0_9, %c0_10] : memref<1x32xf32, #tpu.memory_space<vmem>>, vector<1x32xf32>
    %11 = vector.broadcast %10 : vector<1x32xf32> to vector<16x32xf32>
    %12 = arith.addf %9, %11 : vector<16x32xf32>
    %cst_11 = arith.constant 0.000000e+00 : f32
    %13 = vector.broadcast %cst_11 : f32 to vector<16x32xf32>
    %14 = arith.maximumf %12, %13 : vector<16x32xf32>
    %c0_12 = arith.constant 0 : index
    %c0_13 = arith.constant 0 : index
    %15 = vector.load %arg6[%c0_12, %c0_13] : memref<32x128xf32, #tpu.memory_space<vmem>>, vector<32x128xf32>
    %cst_14 = arith.constant dense<0.000000e+00> : vector<16x128xf32>
    %16 = tpu.matmul %14, %15, %cst_14 {dimension_numbers = #tpu.dot_dimension_numbers<[1], [0], [0], [1], [0, 0, 1, 1], [], []>} : vector<16x32xf32>, vector<32x128xf32>, vector<16x128xf32> -> vector<16x128xf32>
    %c0_15 = arith.constant 0 : index
    %c0_16 = arith.constant 0 : index
    %17 = vector.load %arg7[%c0_15, %c0_16] : memref<1x128xf32, #tpu.memory_space<vmem>>, vector<1x128xf32>
    %18 = vector.broadcast %17 : vector<1x128xf32> to vector<16x128xf32>
    %19 = arith.addf %16, %18 : vector<16x128xf32>
    %20 = tpu.iota {dimensions = array<i32: 1>} : vector<16x128xi32>
    %21 = math.tanh %19 : vector<16x128xf32>
    %cst_17 = arith.constant 2.000000e+00 : f32
    %22 = vector.broadcast %cst_17 : f32 to vector<16x128xf32>
    %23 = arith.mulf %21, %22 : vector<16x128xf32>
    %cst_18 = arith.constant 0.000000e+00 : f32
    %24 = vector.broadcast %cst_18 : f32 to vector<16x128xf32>
    %25 = arith.maximumf %19, %24 : vector<16x128xf32>
    %26 = math.absf %19 : vector<16x128xf32>
    %cst_19 = arith.constant 0.000000e+00 : f32
    %27 = vector.broadcast %cst_19 : f32 to vector<16x128xf32>
    %28 = arith.subf %27, %26 : vector<16x128xf32>
    %29 = math.exp %28 : vector<16x128xf32>
    %30 = math.log1p %29 : vector<16x128xf32>
    %31 = arith.addf %25, %30 : vector<16x128xf32>
    %cst_20 = arith.constant 9.99999974E-6 : f32
    %32 = vector.broadcast %cst_20 : f32 to vector<16x128xf32>
    %33 = arith.addf %31, %32 : vector<16x128xf32>
    %c4_i32 = arith.constant 4 : i32
    %34 = vector.broadcast %c4_i32 : i32 to vector<16x128xi32>
    %35 = arith.cmpi slt, %20, %34 : vector<16x128xi32>
    %36 = arith.select %35, %23, %33 : vector<16x128xi1>, vector<16x128xf32>
    %c0_21 = arith.constant 0 : index
    %c0_22 = arith.constant 0 : index
    %37 = vector.load %arg8[%c0_21, %c0_22] : memref<16x128xf32, #tpu.memory_space<vmem>>, vector<16x128xf32>
    tpu.vector_store %arg8[%c0_21, %c0_22], %36 {strides = array<i32>} : memref<16x128xf32, #tpu.memory_space<vmem>>, vector<16x128xf32>,
    return
  }
  func.func @transform_0(%arg0: i32) -> (i32, i32) {
    %c0_i32 = arith.constant 0 : i32
    %c0_i32_0 = arith.constant 0 : i32
    return %arg0, %c0_i32 : i32, i32
  }
  func.func @transform_1(%arg0: i32) -> (i32, i32) {
    %c0_i32 = arith.constant 0 : i32
    %c0_i32_0 = arith.constant 0 : i32
    %c0_i32_1 = arith.constant 0 : i32
    return %c0_i32, %c0_i32_0 : i32, i32
  }
  func.func @transform_2(%arg0: i32) -> (i32, i32) {
    %c0_i32 = arith.constant 0 : i32
    %c0_i32_0 = arith.constant 0 : i32
    %c0_i32_1 = arith.constant 0 : i32
    return %c0_i32, %c0_i32_0 : i32, i32
  }
  func.func @transform_3(%arg0: i32) -> (i32, i32) {
    %c0_i32 = arith.constant 0 : i32
    %c0_i32_0 = arith.constant 0 : i32
    %c0_i32_1 = arith.constant 0 : i32
    return %c0_i32, %c0_i32_0 : i32, i32
  }
  func.func @transform_4(%arg0: i32) -> (i32, i32) {
    %c0_i32 = arith.constant 0 : i32
    %c0_i32_0 = arith.constant 0 : i32
    %c0_i32_1 = arith.constant 0 : i32
    return %c0_i32, %c0_i32_0 : i32, i32
  }
  func.func @transform_5(%arg0: i32) -> (i32, i32) {
    %c0_i32 = arith.constant 0 : i32
    %c0_i32_0 = arith.constant 0 : i32
    %c0_i32_1 = arith.constant 0 : i32
    return %c0_i32, %c0_i32_0 : i32, i32
  }
  func.func @transform_6(%arg0: i32) -> (i32, i32) {
    %c0_i32 = arith.constant 0 : i32
    %c0_i32_0 = arith.constant 0 : i32
    %c0_i32_1 = arith.constant 0 : i32
    return %c0_i32, %c0_i32_0 : i32, i32
  }
  func.func @transform_7(%arg0: i32) -> (i32, i32) {
    %c0_i32 = arith.constant 0 : i32
    %c0_i32_0 = arith.constant 0 : i32
    return %arg0, %c0_i32 : i32, i32
  }
}

</mosaic_0001>

<llo_original>
// kernel: tpu_custom_call.1
$region0: #{tpu_custom_call.1}
  #allocation0 [shape = 'u32[]', space=smem, size = 0x4, offset = 0x4, fixed_abs, tag = 'smem constant byte address 0x4 - core index']
  #allocation1 [shape = 'u32[144,128]{1,0:T(1,128)}', space=vmem, size = 0x12000, scoped, tag = 'internal scratch']
  %s0 = inlined_call_operand.vmem [shape: f32[32,8], index: 0, kind: input, shape index: {}]
  %s1 = inlined_call_operand.vmem [shape: f32[8,32], index: 1, kind: input, shape index: {}]
  %s2 = inlined_call_operand.vmem [shape: f32[1,32], index: 2, kind: input, shape index: {}]
  %s3 = inlined_call_operand.vmem [shape: f32[32,32], index: 3, kind: input, shape index: {}]
  %s4 = inlined_call_operand.vmem [shape: f32[1,32], index: 4, kind: input, shape index: {}]
  %s5 = inlined_call_operand.hbm [shape: f32[32,128], index: 5, kind: input, shape index: {}]
  %s6 = inlined_call_operand.vmem [shape: f32[1,128], index: 6, kind: input, shape index: {}]
  %s7 = inlined_call_operand.hbm [shape: f32[32,128], index: 7, kind: output, shape index: {}]
  %s8 = sld [smem:[#allocation0]]
  $region65: #{tpu_custom_call.1} parent=0
    _
  %s10 = ssub.s32 1, %s8
  %s11 = scalar_select 0, %s10, %s8
  $region1: #{tpu_custom_call.1} parent=0
    #allocation2 [shape = 'u8[16384]{0}', space=vmem, size = 0x4000, scoped, tag = 'input window, operand 5, single buffered']
    #allocation3 [shape = 's32[2]{0}', space=sflag, size = 0x8, scoped, tag = 'scoped memory for tpu_custom_call.1']
    #allocation4 [shape = 's32[2]{0}', space=sflag, size = 0x8, scoped, tag = 'scoped memory for tpu_custom_call.1']
    #allocation5 [shape = 'u8[16384]{0}', space=vmem, size = 0x4000, scoped, tag = 'output window, operand 0']
    %12 = vsyncpa [#allocation3], 0
    %13 = vsyncpa [#allocation4], 0
    %s14 = scalar_lea.sflag [#allocation4], 1
    %15 = vsyncpa %s14, 0
    loop: start=0, step=1, limit=4
    $region2: #{tpu_custom_call.1} parent=1 // loop_pre_header
      _
    $region3: #{tpu_custom_call.1} parent=1 // loop_header
      %s17 = sphi 0, %s21
      %p18 = scmp.ge.s32.totalorder %s17, 4
      %s27 = sphi 0, %s29
      %s30 = sphi 0, %s27
      %s31 = sphi 0, %s30
      %s47 = sphi 0, %s31
      %s51 = sphi 0, %s51
      %s53 = sphi 0, %s51
      %s54 = sphi 0, %s53
      %s68 = sphi 0, %s54
      %s72 = sphi 0, %s72
      %s74 = sphi 0, %s72
      %s75 = sphi 0, %s74
      %s89 = sphi 0, %s75
      %s93 = sphi 0, %s93
      %s95 = sphi 0, %s93
      %s96 = sphi 0, %s95
      %s110 = sphi 0, %s96
      %s114 = sphi 0, %s114
      %s116 = sphi 0, %s114
      %s117 = sphi 0, %s116
      %s131 = sphi 0, %s117
      %s135 = sphi 0, %s135
      %s137 = sphi 0, %s135
      %s138 = sphi 0, %s137
      %s152 = sphi 0, %s138
      %s156 = sphi 0, %s156
      %s158 = sphi 0, %s156
      %s159 = sphi 0, %s158
      %s173 = sphi 0, %s159
      %s179 = sphi 0, %s181
      %s182 = sphi 0, %s179
      %s183 = sphi 0, %s182
      %s199 = sphi 0, %s183
    $region4: #{tpu_custom_call.1} parent=1 // loop_header_branch
      %20 = sbr.rel (%p18) target = $region8
    $region5: #{tpu_custom_call.1} parent=1 // loop_body
      %s22 = ssub.s32 %s17, 1
      %s23 = ssub.s32 %s17, 2
      %s24 = sadd.s32 %s17, 1
      %s25 = ssub.s32 %s17, %s24
      %p26 = scmp.eq.s32.totalorder %s25, 0
      %s28 = sadd.s32 %s27, 1
      %s29 = scalar_select %p26, %s27, %s28
      %p32 = pneg %p26
      %p33 = scmp.eq.s32.totalorder %s17, 1
      %p34 = por %p32, %p33
      %p35 = scmp.ne.s32.totalorder %s27, %s30
      %p36 = scmp.eq.s32.totalorder %s17, 0
      %p37 = por %p35, %p36
      %p38 = scmp.ne.s32.totalorder %s27, %s30
      %p39 = scmp.eq.s32.totalorder %s22, 1
      %p40 = por %p38, %p39
      %p41 = scmp.ne.s32.totalorder %s30, %s31
      %p42 = scmp.eq.s32.totalorder %s22, 0
      %p43 = por %p41, %p42
      %p44 = scmp.ne.s32.totalorder %s30, %s31
      %p45 = scmp.eq.s32.totalorder %s23, 1
      %p46 = por %p44, %p45
      %p48 = scmp.ne.s32.totalorder %s31, %s47
      %p49 = scmp.eq.s32.totalorder %s23, 0
      %p50 = por %p48, %p49
      %s52 = sadd.s32 %s51, 1
      %p55 = scmp.eq.s32.totalorder %s17, 1
      %p56 = scmp.ne.s32.totalorder %s51, %s53
      %p57 = scmp.eq.s32.totalorder %s17, 0
      %p58 = por %p56, %p57
      %p59 = scmp.ne.s32.totalorder %s51, %s53
      %p60 = scmp.eq.s32.totalorder %s22, 1
      %p61 = por %p59, %p60
      %p62 = scmp.ne.s32.totalorder %s53, %s54
      %p63 = scmp.eq.s32.totalorder %s22, 0
      %p64 = por %p62, %p63
      %p65 = scmp.ne.s32.totalorder %s53, %s54
      %p66 = scmp.eq.s32.totalorder %s23, 1
      %p67 = por %p65, %p66
      %p69 = scmp.ne.s32.totalorder %s54, %s68
      %p70 = scmp.eq.s32.totalorder %s23, 0
      %p71 = por %p69, %p70
      %s73 = sadd.s32 %s72, 1
      %p76 = scmp.eq.s32.totalorder %s17, 1
      %p77 = scmp.ne.s32.totalorder %s72, %s74
      %p78 = scmp.eq.s32.totalorder %s17, 0
      %p79 = por %p77, %p78
      %p80 = scmp.ne.s32.totalorder %s72, %s74
      %p81 = scmp.eq.s32.totalorder %s22, 1
      %p82 = por %p80, %p81
      %p83 = scmp.ne.s32.totalorder %s74, %s75
      %p84 = scmp.eq.s32.totalorder %s22, 0
      %p85 = por %p83, %p84
      %p86 = scmp.ne.s32.totalorder %s74, %s75
      %p87 = scmp.eq.s32.totalorder %s23, 1
      %p88 = por %p86, %p87
      %p90 = scmp.ne.s32.totalorder %s75, %s89
      %p91 = scmp.eq.s32.totalorder %s23, 0
      %p92 = por %p90, %p91
      %s94 = sadd.s32 %s93, 1
      %p97 = scmp.eq.s32.totalorder %s17, 1
      %p98 = scmp.ne.s32.totalorder %s93, %s95
      %p99 = scmp.eq.s32.totalorder %s17, 0
      %p100 = por %p98, %p99
      %p101 = scmp.ne.s32.totalorder %s93, %s95
      %p102 = scmp.eq.s32.totalorder %s22, 1
      %p103 = por %p101, %p102
      %p104 = scmp.ne.s32.totalorder %s95, %s96
      %p105 = scmp.eq.s32.totalorder %s22, 0
      %p106 = por %p104, %p105
      %p107 = scmp.ne.s32.totalorder %s95, %s96
      %p108 = scmp.eq.s32.totalorder %s23, 1
      %p109 = por %p107, %p108
      %p111 = scmp.ne.s32.totalorder %s96, %s110
      %p112 = scmp.eq.s32.totalorder %s23, 0
      %p113 = por %p111, %p112
      %s115 = sadd.s32 %s114, 1
      %p118 = scmp.eq.s32.totalorder %s17, 1
      %p119 = scmp.ne.s32.totalorder %s114, %s116
      %p120 = scmp.eq.s32.totalorder %s17, 0
      %p121 = por %p119, %p120
      %p122 = scmp.ne.s32.totalorder %s114, %s116
      %p123 = scmp.eq.s32.totalorder %s22, 1
      %p124 = por %p122, %p123
      %p125 = scmp.ne.s32.totalorder %s116, %s117
      %p126 = scmp.eq.s32.totalorder %s22, 0
      %p127 = por %p125, %p126
      %p128 = scmp.ne.s32.totalorder %s116, %s117
      %p129 = scmp.eq.s32.totalorder %s23, 1
      %p130 = por %p128, %p129
      %p132 = scmp.ne.s32.totalorder %s117, %s131
      %p133 = scmp.eq.s32.totalorder %s23, 0
      %p134 = por %p132, %p133
      %s136 = sadd.s32 %s135, 1
      %p139 = scmp.eq.s32.totalorder %s17, 1
      %p140 = scmp.ne.s32.totalorder %s135, %s137
      %p141 = scmp.eq.s32.totalorder %s17, 0
      %p142 = por %p140, %p141
      %p143 = scmp.ne.s32.totalorder %s135, %s137
      %p144 = scmp.eq.s32.totalorder %s22, 1
      %p145 = por %p143, %p144
      %p146 = scmp.ne.s32.totalorder %s137, %s138
      %p147 = scmp.eq.s32.totalorder %s22, 0
      %p148 = por %p146, %p147
      %p149 = scmp.ne.s32.totalorder %s137, %s138
      %p150 = scmp.eq.s32.totalorder %s23, 1
      %p151 = por %p149, %p150
      %p153 = scmp.ne.s32.totalorder %s138, %s152
      %p154 = scmp.eq.s32.totalorder %s23, 0
      %p155 = por %p153, %p154
      %s157 = sadd.s32 %s156, 1
      %p160 = scmp.eq.s32.totalorder %s17, 1
      %p161 = scmp.ne.s32.totalorder %s156, %s158
      %p162 = scmp.eq.s32.totalorder %s17, 0
      %p163 = por %p161, %p162
      %p164 = scmp.ne.s32.totalorder %s156, %s158
      %p165 = scmp.eq.s32.totalorder %s22, 1
      %p166 = por %p164, %p165
      %p167 = scmp.ne.s32.totalorder %s158, %s159
      %p168 = scmp.eq.s32.totalorder %s22, 0
      %p169 = por %p167, %p168
      %p170 = scmp.ne.s32.totalorder %s158, %s159
      %p171 = scmp.eq.s32.totalorder %s23, 1
      %p172 = por %p170, %p171
      %p174 = scmp.ne.s32.totalorder %s159, %s173
      %p175 = scmp.eq.s32.totalorder %s23, 0
      %p176 = por %p174, %p175
      %s177 = ssub.s32 %s17, %s24
      %p178 = scmp.eq.s32.totalorder %s177, 0
      %s180 = sadd.s32 %s179, 1
      %s181 = scalar_select %p178, %s179, %s180
      %p184 = pneg %p178
      %p185 = scmp.eq.s32.totalorder %s17, 1
      %p186 = por %p184, %p185
      %p187 = scmp.ne.s32.totalorder %s179, %s182
      %p188 = scmp.eq.s32.totalorder %s17, 0
      %p189 = por %p187, %p188
      %p190 = scmp.ne.s32.totalorder %s179, %s182
      %p191 = scmp.eq.s32.totalorder %s22, 1
      %p192 = por %p190, %p191
      %p193 = scmp.ne.s32.totalorder %s182, %s183
      %p194 = scmp.eq.s32.totalorder %s22, 0
      %p195 = por %p193, %p194
      %p196 = scmp.ne.s32.totalorder %s182, %s183
      %p197 = scmp.eq.s32.totalorder %s23, 1
      %p198 = por %p196, %p197
      %p200 = scmp.ne.s32.totalorder %s183, %s199
      %p201 = scmp.eq.s32.totalorder %s23, 0
      %p202 = por %p200, %p201
      %p203 = scmp.le.s32.totalorder 1, %s17
      %p204 = scmp.lt.s32.totalorder %s17, 3
      %p205 = pnand %p203, %p204
      %p206 = pneg %p205
      // Predicated region
      $region9: #{tpu_custom_call.1} parent=5 // pred_check
        _
      $region10: #{tpu_custom_call.1} parent=5 // pred_check_branch
        %208 = sbr.rel (%p205) target = $region12
      $region11: #{tpu_custom_call.1} parent=5 // pred_region
        %s209 = ssub.s32 %s17, 1
        // Predicated region
        $region13: #{tpu_custom_call.1} parent=11 // pred_check
          %p210 = pneg %p64
        $region14: #{tpu_custom_call.1} parent=11 // pred_check_branch
          %212 = sbr.rel (%p210) target = $region16
        $region15: #{tpu_custom_call.1} parent=11 // pred_region
          _
        $region16: #{tpu_custom_call.1} parent=11 // pred_fallthru
          _
        // Predicated region
        $region17: #{tpu_custom_call.1} parent=11 // pred_check
          %p213 = pneg %p85
        $region18: #{tpu_custom_call.1} parent=11 // pred_check_branch
          %215 = sbr.rel (%p213) target = $region20
        $region19: #{tpu_custom_call.1} parent=11 // pred_region
          _
        $region20: #{tpu_custom_call.1} parent=11 // pred_fallthru
          _
        // Predicated region
        $region21: #{tpu_custom_call.1} parent=11 // pred_check
          %p216 = pneg %p106
        $region22: #{tpu_custom_call.1} parent=11 // pred_check_branch
          %218 = sbr.rel (%p216) target = $region24
        $region23: #{tpu_custom_call.1} parent=11 // pred_region
          _
        $region24: #{tpu_custom_call.1} parent=11 // pred_fallthru
          _
        // Predicated region
        $region25: #{tpu_custom_call.1} parent=11 // pred_check
          %p219 = pneg %p127
        $region26: #{tpu_custom_call.1} parent=11 // pred_check_branch
          %221 = sbr.rel (%p219) target = $region28
        $region27: #{tpu_custom_call.1} parent=11 // pred_region
          _
        $region28: #{tpu_custom_call.1} parent=11 // pred_fallthru
          _
        // Predicated region
        $region29: #{tpu_custom_call.1} parent=11 // pred_check
          %p222 = pneg %p148
        $region30: #{tpu_custom_call.1} parent=11 // pred_check_branch
          %224 = sbr.rel (%p222) target = $region32
        $region31: #{tpu_custom_call.1} parent=11 // pred_region
          %s226 = ssub.s32 512, 512
          %227 = vsyncadd [#allocation3], %s226
          %s228 = sshll.u32 [#allocation2], 4
          %s229 = int_to_ptr.vmem [resolvable:$true] %s228
          %234 = dma.hbm_to_vmem [thread:$0]  %s5, 512, %s229, [#allocation3], 128, 128, 8
        $region32: #{tpu_custom_call.1} parent=11 // pred_fallthru
          _
        // Predicated region
        $region33: #{tpu_custom_call.1} parent=11 // pred_check
          %p235 = pneg %p169
        $region34: #{tpu_custom_call.1} parent=11 // pred_check_branch
          %237 = sbr.rel (%p235) target = $region36
        $region35: #{tpu_custom_call.1} parent=11 // pred_region
          _
        $region36: #{tpu_custom_call.1} parent=11 // pred_fallthru
          _
      $region12: #{tpu_custom_call.1} parent=5 // pred_fallthru
        _
      %p238 = scmp.lt.s32.totalorder %s17, 2
      // Predicated region
      $region37: #{tpu_custom_call.1} parent=5 // pred_check
        %p239 = pneg %p238
      $region38: #{tpu_custom_call.1} parent=5 // pred_check_branch
        %241 = sbr.rel (%p239) target = $region40
      $region39: #{tpu_custom_call.1} parent=5 // pred_region
        // Predicated region
        $region41: #{tpu_custom_call.1} parent=39 // pred_check
          %p242 = pneg %p37
        $region42: #{tpu_custom_call.1} parent=39 // pred_check_branch
          %244 = sbr.rel (%p242) target = $region44
        $region43: #{tpu_custom_call.1} parent=39 // pred_region
          %s245 = smul.u32 2, %s17
          %p246 = scmp.lt.s32.totalorder %s245, 3
          %s247 = scalar_select %p246, %s245, 3
          %s248 = smul.addr %s247, 8
          %s249 = scalar_lea.vmem %s0, %s248
          %s250 = smul.u32 2, %s17
        $region44: #{tpu_custom_call.1} parent=39 // pred_fallthru
          _
      $region40: #{tpu_custom_call.1} parent=5 // pred_fallthru
        _
      %p251 = scmp.le.s32.totalorder 1, %s17
      %p252 = scmp.lt.s32.totalorder %s17, 3
      %p253 = pnand %p251, %p252
      %p254 = pneg %p253
      // Predicated region
      $region45: #{tpu_custom_call.1} parent=5 // pred_check
        _
      $region46: #{tpu_custom_call.1} parent=5 // pred_check_branch
        %256 = sbr.rel (%p253) target = $region48
      $region47: #{tpu_custom_call.1} parent=5 // pred_region
        %s257 = ssub.s32 %s17, 1
        // Predicated region
        $region49: #{tpu_custom_call.1} parent=47 // pred_check
          %p258 = pneg %p148
        $region50: #{tpu_custom_call.1} parent=47 // pred_check_branch
          %260 = sbr.rel (%p258) target = $region52
        $region51: #{tpu_custom_call.1} parent=47 // pred_region
          %261 = dma.done [#allocation3], 512
        $region52: #{tpu_custom_call.1} parent=47 // pred_fallthru
          _
        %s262 = smul.u32 2, %s22
        %p263 = scmp.lt.s32.totalorder %s262, 3
        %s264 = scalar_select %p263, %s262, 3
        %s265 = smul.addr %s264, 8
        %s266 = scalar_lea.vmem %s0, %s265
        %p267 = pneg %p43
        %p268 = pneg %p40
        %p269 = pneg %p64
        %p270 = pneg %p61
        %p271 = pneg %p85
        %p272 = pneg %p82
        %p273 = pneg %p106
        %p274 = pneg %p103
        %p275 = pneg %p127
        %p276 = pneg %p124
        %p277 = pneg %p148
        %p278 = pneg %p145
        %p279 = pneg %p169
        %p280 = pneg %p166
        %p281 = pneg %p195
        %p282 = pneg %p192
        %s283 = sand.u32 %s182, 1
        %s284 = scalar_lea.sflag [#allocation4], %s283
        %s285 = sand.u32 %s182, 1
        %s286 = smul.addr %s285, 16
        %s287 = scalar_lea.vmem [#allocation5], %s286
        %s288 = smul.u32 2, %s22
        %p289 = scmp.lt.s32.totalorder %s288, 3
        %s290 = scalar_select %p289, %s288, 3
        %s291 = smul.addr %s290, 8
        %s292 = scalar_lea.vmem %s0, %s291
        %s293 = smul.u32 2, %s22
        %s294 = smul.u32 2, %s22
        %v295 = vld [vmem:[%s292] sm:$0xff]
        %v296 = vld [vmem:[%s292 + $0x8] sm:$0xff]
        %v297 = vld [vmem:[%s1] sm:$0xff]
        %v298 = vld [vmem:[%s2] sm:$0x1]
        %v300 = vlaneseq
        %v301 = vshrl.u32 %v300, 7
        %v302 = vsub.s32 0, %v301
        %v303 = vrot.slane %v298, %v302
        %vm305 = vcmask 64512
        %v307 = vsel %vm305, %v295, 0
        %v310 = vsel %vm305, %v296, 0
        %312 = vmatprep.subr.mxu0 0.0
        %313 = vmatpush1.msra.mxu0 0.0
        %314 = vmatprep.subr.mxu0 0.0
        %315 = vmatpush1.msra.mxu0 0.0
        %316 = vmatprep.subr.mxu0 0.0
        %317 = vmatpush1.msra.mxu0 0.0
        %318 = vmatprep.subr.mxu0 0.0
        %319 = vmatpush1.msra.mxu0 0.0
        %320 = vmatprep.subr.mxu0 0.0
        %321 = vmatpush1.msra.mxu0 0.0
        %322 = vmatprep.subr.mxu0 0.0
        %323 = vmatpush1.msra.mxu0 0.0
        %324 = vmatprep.subr.mxu0 0.0
        %325 = vmatpush1.msra.mxu0 0.0
        %326 = vmatprep.subr.mxu0 0.0
        %327 = vmatpush1.msra.mxu0 0.0
        %328 = vmatprep.subr.mxu0 0.0
        %329 = vmatpush1.msra.mxu0 0.0
        %330 = vmatprep.subr.mxu0 0.0
        %331 = vmatpush1.msra.mxu0 0.0
        %332 = vmatprep.subr.mxu0 0.0
        %333 = vmatpush1.msra.mxu0 0.0
        %334 = vmatprep.subr.mxu0 0.0
        %335 = vmatpush1.msra.mxu0 0.0
        %336 = vmatprep.subr.mxu0 0.0
        %337 = vmatpush1.msra.mxu0 0.0
        %338 = vmatprep.subr.mxu0 0.0
        %339 = vmatpush1.msra.mxu0 0.0
        %340 = vmatprep.subr.mxu0 0.0
        %341 = vmatpush1.msra.mxu0 0.0
        %342 = vmatprep.subr.mxu0 0.0
        %343 = vmatpush1.msra.mxu0 %v297
        %344 = vmatprep.subr.mxu0 0.0
        %345 = vmatpush2.msra.mxu0 0.0
        %346 = vmatprep.subr.mxu0 0.0
        %347 = vmatpush2.msra.mxu0 0.0
        %348 = vmatprep.subr.mxu0 0.0
        %349 = vmatpush2.msra.mxu0 0.0
        %350 = vmatprep.subr.mxu0 0.0
        %351 = vmatpush2.msra.mxu0 0.0
        %352 = vmatprep.subr.mxu0 0.0
        %353 = vmatpush2.msra.mxu0 0.0
        %354 = vmatprep.subr.mxu0 0.0
        %355 = vmatpush2.msra.mxu0 0.0
        %356 = vmatprep.subr.mxu0 0.0
        %357 = vmatpush2.msra.mxu0 0.0
        %358 = vmatprep.subr.mxu0 0.0
        %359 = vmatpush2.msra.mxu0 0.0
        %360 = vmatprep.subr.mxu0 0.0
        %361 = vmatpush2.msra.mxu0 0.0
        %362 = vmatprep.subr.mxu0 0.0
        %363 = vmatpush2.msra.mxu0 0.0
        %364 = vmatprep.subr.mxu0 0.0
        %365 = vmatpush2.msra.mxu0 0.0
        %366 = vmatprep.subr.mxu0 0.0
        %367 = vmatpush2.msra.mxu0 0.0
        %368 = vmatprep.subr.mxu0 0.0
        %369 = vmatpush2.msra.mxu0 0.0
        %370 = vmatprep.subr.mxu0 0.0
        %371 = vmatpush2.msra.mxu0 0.0
        %372 = vmatprep.subr.mxu0 0.0
        %373 = vmatpush2.msra.mxu0 0.0
        %374 = vmatprep.subr.mxu0 0.0
        %375 = vmatpush2.msra.mxu0 0.0
        %376 = vmatprep.mubr.f32.mxu0 0.0
        %377 = vmatmul.mubr.f32.gmra.mxu0 %v307
        %v378 = vpop.f32.mrf.mxu0
        %v379 = vadd.f32 %v303, %v378
        %v380 = vpop.f32.mrf.mxu0
        %381 = vmatprep.mubr.f32.mxu0 0.0
        %382 = vmatmul.mubr.f32.gmra.mxu0 %v310
        %v383 = vpop.f32.mrf.mxu0
        %v384 = vadd.f32 %v303, %v383
        %v385 = vpop.f32.mrf.mxu0
        %386 = vdwg.mxu0
        %v387 = vmax.f32 %v379, 0.0
        %v388 = vmax.f32 %v384, 0.0
        %v389 = vld [vmem:[%s3] sm:$0xff]
        %v390 = vld [vmem:[%s3 + $0x8] sm:$0xff]
        %v391 = vld [vmem:[%s3 + $0x10] sm:$0xff]
        %v392 = vld [vmem:[%s3 + $0x18] sm:$0xff]
        %v393 = vld [vmem:[%s4] sm:$0x1]
        %v395 = vlaneseq
        %v396 = vshrl.u32 %v395, 7
        %v397 = vsub.s32 0, %v396
        %v398 = vrot.slane %v393, %v397
        %vm400 = vcmask 261120
        %v402 = vsel %vm400, %v387, 0
        %v405 = vsel %vm400, %v388, 0
        %407 = vmatprep.subr.mxu0 0.0
        %408 = vmatpush1.msra.mxu0 0.0
        %409 = vmatprep.subr.mxu0 0.0
        %410 = vmatpush1.msra.mxu0 0.0
        %411 = vmatprep.subr.mxu0 0.0
        %412 = vmatpush1.msra.mxu0 0.0
        %413 = vmatprep.subr.mxu0 0.0
        %414 = vmatpush1.msra.mxu0 0.0
        %415 = vmatprep.subr.mxu0 0.0
        %416 = vmatpush1.msra.mxu0 0.0
        %417 = vmatprep.subr.mxu0 0.0
        %418 = vmatpush1.msra.mxu0 0.0
        %419 = vmatprep.subr.mxu0 0.0
        %420 = vmatpush1.msra.mxu0 0.0
        %421 = vmatprep.subr.mxu0 0.0
        %422 = vmatpush1.msra.mxu0 0.0
        %423 = vmatprep.subr.mxu0 0.0
        %424 = vmatpush1.msra.mxu0 0.0
        %425 = vmatprep.subr.mxu0 0.0
        %426 = vmatpush1.msra.mxu0 0.0
        %427 = vmatprep.subr.mxu0 0.0
        %428 = vmatpush1.msra.mxu0 0.0
        %429 = vmatprep.subr.mxu0 0.0
        %430 = vmatpush1.msra.mxu0 0.0
        %431 = vmatprep.subr.mxu0 0.0
        %432 = vmatpush1.msra.mxu0 %v392
        %433 = vmatprep.subr.mxu0 0.0
        %434 = vmatpush1.msra.mxu0 %v391
        %435 = vmatprep.subr.mxu0 0.0
        %436 = vmatpush1.msra.mxu0 %v390
        %437 = vmatprep.subr.mxu0 0.0
        %438 = vmatpush1.msra.mxu0 %v389
        %439 = vmatprep.subr.mxu0 0.0
        %440 = vmatpush2.msra.mxu0 0.0
        %441 = vmatprep.subr.mxu0 0.0
        %442 = vmatpush2.msra.mxu0 0.0
        %443 = vmatprep.subr.mxu0 0.0
        %444 = vmatpush2.msra.mxu0 0.0
        %445 = vmatprep.subr.mxu0 0.0
        %446 = vmatpush2.msra.mxu0 0.0
        %447 = vmatprep.subr.mxu0 0.0
        %448 = vmatpush2.msra.mxu0 0.0
        %449 = vmatprep.subr.mxu0 0.0
        %450 = vmatpush2.msra.mxu0 0.0
        %451 = vmatprep.subr.mxu0 0.0
        %452 = vmatpush2.msra.mxu0 0.0
        %453 = vmatprep.subr.mxu0 0.0
        %454 = vmatpush2.msra.mxu0 0.0
        %455 = vmatprep.subr.mxu0 0.0
        %456 = vmatpush2.msra.mxu0 0.0
        %457 = vmatprep.subr.mxu0 0.0
        %458 = vmatpush2.msra.mxu0 0.0
        %459 = vmatprep.subr.mxu0 0.0
        %460 = vmatpush2.msra.mxu0 0.0
        %461 = vmatprep.subr.mxu0 0.0
        %462 = vmatpush2.msra.mxu0 0.0
        %463 = vmatprep.subr.mxu0 0.0
        %464 = vmatpush2.msra.mxu0 0.0
        %465 = vmatprep.subr.mxu0 0.0
        %466 = vmatpush2.msra.mxu0 0.0
        %467 = vmatprep.subr.mxu0 0.0
        %468 = vmatpush2.msra.mxu0 0.0
        %469 = vmatprep.subr.mxu0 0.0
        %470 = vmatpush2.msra.mxu0 0.0
        %471 = vmatprep.mubr.f32.mxu0 0.0
        %472 = vmatmul.mubr.f32.gmra.mxu0 %v402
        %v473 = vpop.f32.mrf.mxu0
        %v474 = vadd.f32 %v398, %v473
        %v475 = vpop.f32.mrf.mxu0
        %476 = vmatprep.mubr.f32.mxu0 0.0
        %477 = vmatmul.mubr.f32.gmra.mxu0 %v405
        %v478 = vpop.f32.mrf.mxu0
        %v479 = vadd.f32 %v398, %v478
        %v480 = vpop.f32.mrf.mxu0
        %481 = vdwg.mxu0
        %v482 = vmax.f32 %v474, 0.0
        %v483 = vmax.f32 %v479, 0.0
        %v484 = vld [vmem:[#allocation2] sm:$0xff]
        %v485 = vld [vmem:[#allocation2 + $0x8] sm:$0xff]
        %v486 = vld [vmem:[#allocation2 + $0x10] sm:$0xff]
        %v487 = vld [vmem:[#allocation2 + $0x18] sm:$0xff]
        %v488 = vld [vmem:[%s6] sm:$0x1]
        %v490 = vlaneseq
        %v491 = vshrl.u32 %v490, 7
        %v492 = vsub.s32 0, %v491
        %v493 = vrot.slane %v488, %v492
        %v496 = vsel %vm400, %v482, 0
        %v499 = vsel %vm400, %v483, 0
        %501 = vmatprep.subr.mxu0 0.0
        %502 = vmatpush1.msra.mxu0 0.0
        %503 = vmatprep.subr.mxu0 0.0
        %504 = vmatpush1.msra.mxu0 0.0
        %505 = vmatprep.subr.mxu0 0.0
        %506 = vmatpush1.msra.mxu0 0.0
        %507 = vmatprep.subr.mxu0 0.0
        %508 = vmatpush1.msra.mxu0 0.0
        %509 = vmatprep.subr.mxu0 0.0
        %510 = vmatpush1.msra.mxu0 0.0
        %511 = vmatprep.subr.mxu0 0.0
        %512 = vmatpush1.msra.mxu0 0.0
        %513 = vmatprep.subr.mxu0 0.0
        %514 = vmatpush1.msra.mxu0 0.0
        %515 = vmatprep.subr.mxu0 0.0
        %516 = vmatpush1.msra.mxu0 0.0
        %517 = vmatprep.subr.mxu0 0.0
        %518 = vmatpush1.msra.mxu0 0.0
        %519 = vmatprep.subr.mxu0 0.0
        %520 = vmatpush1.msra.mxu0 0.0
        %521 = vmatprep.subr.mxu0 0.0
        %522 = vmatpush1.msra.mxu0 0.0
        %523 = vmatprep.subr.mxu0 0.0
        %524 = vmatpush1.msra.mxu0 0.0
        %525 = vmatprep.subr.mxu0 0.0
        %526 = vmatpush1.msra.mxu0 %v487
        %527 = vmatprep.subr.mxu0 0.0
        %528 = vmatpush1.msra.mxu0 %v486
        %529 = vmatprep.subr.mxu0 0.0
        %530 = vmatpush1.msra.mxu0 %v485
        %531 = vmatprep.subr.mxu0 0.0
        %532 = vmatpush1.msra.mxu0 %v484
        %533 = vmatprep.subr.mxu0 0.0
        %534 = vmatpush2.msra.mxu0 0.0
        %535 = vmatprep.subr.mxu0 0.0
        %536 = vmatpush2.msra.mxu0 0.0
        %537 = vmatprep.subr.mxu0 0.0
        %538 = vmatpush2.msra.mxu0 0.0
        %539 = vmatprep.subr.mxu0 0.0
        %540 = vmatpush2.msra.mxu0 0.0
        %541 = vmatprep.subr.mxu0 0.0
        %542 = vmatpush2.msra.mxu0 0.0
        %543 = vmatprep.subr.mxu0 0.0
        %544 = vmatpush2.msra.mxu0 0.0
        %545 = vmatprep.subr.mxu0 0.0
        %546 = vmatpush2.msra.mxu0 0.0
        %547 = vmatprep.subr.mxu0 0.0
        %548 = vmatpush2.msra.mxu0 0.0
        %549 = vmatprep.subr.mxu0 0.0
        %550 = vmatpush2.msra.mxu0 0.0
        %551 = vmatprep.subr.mxu0 0.0
        %552 = vmatpush2.msra.mxu0 0.0
        %553 = vmatprep.subr.mxu0 0.0
        %554 = vmatpush2.msra.mxu0 0.0
        %555 = vmatprep.subr.mxu0 0.0
        %556 = vmatpush2.msra.mxu0 0.0
        %557 = vmatprep.subr.mxu0 0.0
        %558 = vmatpush2.msra.mxu0 0.0
        %559 = vmatprep.subr.mxu0 0.0
        %560 = vmatpush2.msra.mxu0 0.0
        %561 = vmatprep.subr.mxu0 0.0
        %562 = vmatpush2.msra.mxu0 0.0
        %563 = vmatprep.subr.mxu0 0.0
        %564 = vmatpush2.msra.mxu0 0.0
        %565 = vmatprep.mubr.f32.mxu0 0.0
        %566 = vmatmul.mubr.f32.gmra.mxu0 %v496
        %v567 = vpop.f32.mrf.mxu0
        %v568 = vadd.f32 %v493, %v567
        %v569 = vpop.f32.mrf.mxu0
        %570 = vmatprep.mubr.f32.mxu0 0.0
        %571 = vmatmul.mubr.f32.gmra.mxu0 %v499
        %v572 = vpop.f32.mrf.mxu0
        %v573 = vadd.f32 %v493, %v572
        %v574 = vpop.f32.mrf.mxu0
        %575 = vdwg.mxu0
        %v576 = vlaneseq
        %v577 = vand.u32 %v576, 127
        %v578 = vtanh.pop %v568
        %v579 = vtanh.pop %v573
        %v580 = vmul.f32 %v578, 2.0
        %v581 = vmul.f32 %v579, 2.0
        %v582 = vmax.f32 %v568, 0.0
        %v583 = vmax.f32 %v573, 0.0
        %v584 = vand.u32 2147483647, %v568
        %v585 = vand.u32 2147483647, %v573
        %v586 = vsub.f32 0.0, %v584
        %v587 = vsub.f32 0.0, %v585
        %v588 = vmul.f32 %v586, 1.442695
        %v589 = vpow.pop %v588
        %v590 = vmul.f32 %v587, 1.442695
        %v591 = vpow.pop %v590
        %v592 = vadd.f32 %v589, 1.0
        %v593 = vlog2.pop %v592
        %v594 = vmul.f32 %v593, 0.6931472
        %v595 = vmul.f32 -0.5, %v589
        %v596 = vadd.f32 %v595, 1.0
        %v597 = vmul.f32 %v596, %v589
        %v598 = vand.u32 2147483647, %v589
        %vm599 = vcmp.lt.f32.partialorder %v598, 0.0004427343
        %v600 = vsel %vm599, %v597, %v594
        %v601 = vadd.f32 %v591, 1.0
        %v602 = vlog2.pop %v601
        %v603 = vmul.f32 %v602, 0.6931472
        %v604 = vmul.f32 -0.5, %v591
        %v605 = vadd.f32 %v604, 1.0
        %v606 = vmul.f32 %v605, %v591
        %v607 = vand.u32 2147483647, %v591
        %vm608 = vcmp.lt.f32.partialorder %v607, 0.0004427343
        %v609 = vsel %vm608, %v606, %v603
        %v610 = vadd.f32 %v582, %v600
        %v611 = vadd.f32 %v583, %v609
        %v612 = vadd.f32 %v610, 1e-05
        %v613 = vadd.f32 %v611, 1e-05
        %vm614 = vcmp.lt.s32.totalorder %v577, 4
        %v615 = vsel %vm614, %v580, %v612
        %v616 = vsel %vm614, %v581, %v613
        %617 = vst [vmem:[%s287] sm:$0xff] %v615
        %618 = vst [vmem:[%s287 + $0x8] sm:$0xff] %v616
        %s619 = sand.u32 %s182, 1
        %s620 = scalar_lea.sflag [#allocation4], %s619
        %s621 = sand.u32 %s182, 1
        %s622 = smul.addr %s621, 16
        %s623 = scalar_lea.vmem [#allocation5], %s622
        // Predicated region
        $region53: #{tpu_custom_call.1} parent=47 // pred_check
          %p624 = pneg %p192
        $region54: #{tpu_custom_call.1} parent=47 // pred_check_branch
          %626 = sbr.rel (%p624) target = $region56
        $region55: #{tpu_custom_call.1} parent=47 // pred_region
          %s627 = smul.u32 2, %s22
          %s629 = ssub.s32 256, 256
          %630 = vsyncadd %s620, %s629
          %s631 = smul.addr %s627, 128
          %s632 = scalar_lea.hbm %s7, %s631
          %s633 = sshll.u32 %s623, 4
          %s634 = int_to_ptr.vmem [resolvable:$true] %s633
          %639 = dma.vmem_to_hbm [thread:$0]  %s634, 256, %s632, %s620, 128, 128, 8
        $region56: #{tpu_custom_call.1} parent=47 // pred_fallthru
          _
      $region48: #{tpu_custom_call.1} parent=5 // pred_fallthru
        _
      %p640 = scmp.le.s32.totalorder 2, %s17
      // Predicated region
      $region57: #{tpu_custom_call.1} parent=5 // pred_check
        %p641 = pneg %p640
      $region58: #{tpu_custom_call.1} parent=5 // pred_check_branch
        %643 = sbr.rel (%p641) target = $region60
      $region59: #{tpu_custom_call.1} parent=5 // pred_region
        %s644 = ssub.s32 %s17, 2
        // Predicated region
        $region61: #{tpu_custom_call.1} parent=59 // pred_check
          %p645 = pneg %p198
        $region62: #{tpu_custom_call.1} parent=59 // pred_check_branch
          %647 = sbr.rel (%p645) target = $region64
        $region63: #{tpu_custom_call.1} parent=59 // pred_region
          %s648 = sand.u32 %s183, 1
          %s649 = scalar_lea.sflag [#allocation4], %s648
          %s650 = sand.u32 %s183, 1
          %s651 = smul.addr %s650, 16
          %s652 = scalar_lea.vmem [#allocation5], %s651
          %653 = dma.done %s649, 256
        $region64: #{tpu_custom_call.1} parent=59 // pred_fallthru
          _
      $region60: #{tpu_custom_call.1} parent=5 // pred_fallthru
        _
    $region6: #{tpu_custom_call.1} parent=1 // loop_footer
      %s21 = sadd.s32 1, %s17
    $region7: #{tpu_custom_call.1} parent=1 // loop_footer_branch
      %16 = sbr.rel target = $region3
    $region8: #{tpu_custom_call.1} parent=1 // loop_exit
      _
    %654 = vsyncpa [#allocation3], 1
    %s655 = scalar_lea.sflag [#allocation3], 1
    %656 = vsyncpa %s655, 1
    %657 = vsyncpa [#allocation4], 1
    %s658 = scalar_lea.sflag [#allocation4], 1
    %659 = vsyncpa %s658, 1

</llo_original>
